<compile_context>
chip_gen: v7x
topology: tpu7x:2x2x1
jax: 0.10.0
libtpu: 0.0.40
codegen_flags: <defaults>
</compile_context>

<pallas_src>
import jax
import jax.numpy as jnp
from jax.experimental import pallas as pl
from jax.experimental.pallas import tpu as pltpu


def _round_up(x, m):
    return ((x + m - 1) // m) * m


def _cbp_attention_kernel(img_ref, text_ref, a1r_ref, a1i_ref, a2r_ref, a2i_ref,
                          idr_ref, idi_ref, out_ref):
    img = img_ref[...]                                   # (TM, D) f32
    text = text_ref[...]                                 # (TM, D) f32
    img_bf = img.astype(jnp.bfloat16)
    text_bf = text.astype(jnp.bfloat16)

    # Sketch + forward DFT folded into a single matmul each (real / imag parts).
    xr = jnp.dot(img_bf, a1r_ref[...], preferred_element_type=jnp.float32)
    xi = jnp.dot(img_bf, a1i_ref[...], preferred_element_type=jnp.float32)
    yr = jnp.dot(text_bf, a2r_ref[...], preferred_element_type=jnp.float32)
    yi = jnp.dot(text_bf, a2i_ref[...], preferred_element_type=jnp.float32)

    # Pointwise complex multiply of the two spectra (VPU).
    zr = (xr * yr - xi * yi).astype(jnp.bfloat16)
    zi = (xr * yi + xi * yr).astype(jnp.bfloat16)

    # Inverse DFT (real part); the 1/(500*D) scale is folded into idr/idi.
    logits = (jnp.dot(zr, idr_ref[...], preferred_element_type=jnp.float32)
              - jnp.dot(zi, idi_ref[...], preferred_element_type=jnp.float32))

    # Softmax over the lane (feature) dim -- full dim resident in-block.
    m = jnp.max(logits, axis=-1, keepdims=True)
    e = jnp.exp(logits - m)
    inv = pl.reciprocal(jnp.sum(e, axis=-1, keepdims=True), approx=True)
    att = e * inv

    out_ref[...] = img + img * att


def make_cbp_attention_mats(sketch1, sketch2):
    """Fold the count-sketch matrices into DFT matrices (done once at setup).

    Returns bf16 matrices:
      a1r/a1i : sketch1 @ (cos / -sin)   -> real/imag of rfft(img @ sketch1)
      a2r/a2i : sketch2 @ (cos / -sin)
      idr/idi : cos/sin of the inverse DFT with 1/(500*D) folded in.
    """
    d = sketch1.shape[1]
    k = jnp.arange(d, dtype=jnp.int32)
    # Reduce k*j mod d before the float angle to keep f32 angles accurate.
    kj = (k[:, None] * k[None, :]) % d
    ang = (2.0 * jnp.pi / d) * kj.astype(jnp.float32)
    cos = jnp.cos(ang)
    sin = jnp.sin(ang)

    s1 = sketch1.astype(jnp.float32)
    s2 = sketch2.astype(jnp.float32)
    a1r = s1 @ cos
    a1i = s1 @ (-sin)
    a2r = s2 @ cos
    a2i = s2 @ (-sin)

    scale = 1.0 / (500.0 * d)        # inverse-DFT 1/D and the /500 temperature
    idr = cos * scale
    idi = sin * scale
    return tuple(m.astype(jnp.bfloat16) for m in (a1r, a1i, a2r, a2i, idr, idi))


def cbp_attention(img, text, mats, *, block_rows=256):
    """img, text: (..., dim) -> flattened to (-1, dim), matching the PyTorch forward."""
    a1r, a1i, a2r, a2i, idr, idi = mats
    dim = a1r.shape[0]
    img2 = img.reshape(-1, dim).astype(jnp.float32)
    text2 = text.reshape(-1, dim).astype(jnp.float32)
    n = img2.shape[0]

    # Row tile: multiple of 8 (sublane), capped by the (padded) row count.
    bm = _round_up(min(block_rows, _round_up(n, 8)), 8)
    n_pad = _round_up(n, bm)
    if n_pad != n:
        pad = n_pad - n
        img2 = jnp.pad(img2, ((0, pad), (0, 0)))
        text2 = jnp.pad(text2, ((0, pad), (0, 0)))

    # NOTE: the six (D,D) matrices use a constant index_map, so Pallas keeps the
    # same block resident across grid steps (no re-fetch per step).
    mat_spec = pl.BlockSpec((dim, dim), lambda i: (0, 0))
    row_spec = pl.BlockSpec((bm, dim), lambda i: (i, 0))

    out = pl.pallas_call(
        _cbp_attention_kernel,
        out_shape=jax.ShapeDtypeStruct((n_pad, dim), jnp.float32),
        grid_spec=pltpu.PrefetchScalarGridSpec(
            num_scalar_prefetch=0,
            grid=(n_pad // bm,),
            in_specs=[row_spec, row_spec,
                      mat_spec, mat_spec, mat_spec, mat_spec, mat_spec, mat_spec],
            out_specs=row_spec,
        ),
        compiler_params=pltpu.CompilerParams(
            dimension_semantics=("parallel",),
            vmem_limit_bytes=32 * 1024 * 1024,
        ),
    )(img2, text2, a1r, a1i, a2r, a2i, idr, idi)

    return out[:n]


def make_sketch_matrix(key, in_dim, out_dim):
    """Dense count-sketch matrix: S[i, h[i]] = s[i] in {-1,+1}, zeros elsewhere."""
    kh, ks = jax.random.split(key)
    h = jax.random.randint(kh, (in_dim,), 0, out_dim)
    s = 2.0 * jax.random.bernoulli(ks, 0.5, (in_dim,)).astype(jnp.float32) - 1.0
    return jnp.zeros((in_dim, out_dim), jnp.float32).at[jnp.arange(in_dim), h].set(s)


def cbp_attention_ref(img, text, sketch1, sketch2):
    """Pure-JAX reference using the FFT formulation of CompactBilinearPooling."""
    dim = sketch1.shape[1]
    x = img.reshape(-1, dim).astype(jnp.float32)
    y = text.reshape(-1, dim).astype(jnp.float32)
    xs = x @ sketch1
    ys = y @ sketch2
    conv = jnp.fft.irfft(
        jnp.fft.rfft(xs, axis=-1) * jnp.fft.rfft(ys, axis=-1), n=dim, axis=-1)
    att = jax.nn.softmax(conv / 500.0, axis=-1)
    return x + x * att


if __name__ == "__main__":
    dim = 128          # module default is 512; small, lane-aligned size for demo
    batch, seq = 2, 8  # flattened to 16 rows by view(-1, dim)

    key = jax.random.PRNGKey(0)
    k_img, k_txt, k_s1, k_s2 = jax.random.split(key, 4)
    img = jax.random.normal(k_img, (batch, seq, dim), jnp.float32)
    text = jax.random.normal(k_txt, (batch, seq, dim), jnp.float32)

    # Deterministic, non-trainable count-sketch parameters (as in CBP.__init__).
    sketch1 = make_sketch_matrix(k_s1, dim, dim)
    sketch2 = make_sketch_matrix(k_s2, dim, dim)

    # Fold sketch + DFT matrices once (module-init-time constants).
    mats = make_cbp_attention_mats(sketch1, sketch2)

    out = cbp_attention(img, text, mats)
    jax.block_until_ready(out)

    ref = cbp_attention_ref(img, text, sketch1, sketch2)
    err = float(jnp.max(jnp.abs(out - ref)))
    if err > 1e-3:
        raise SystemExit(f"kernel/reference mismatch: max abs err = {err}")

    print("KERNEL_OK")
</pallas_src>

<mosaic_0001>
module attributes {stable_mosaic.version = 11 : i64} {
  func.func @_cbp_attention_kernel(%arg0: i32, %arg1: memref<16x128xf32, #tpu.memory_space<vmem>>, %arg2: memref<16x128xf32, #tpu.memory_space<vmem>>, %arg3: memref<128x128xbf16, #tpu.memory_space<vmem>>, %arg4: memref<128x128xbf16, #tpu.memory_space<vmem>>, %arg5: memref<128x128xbf16, #tpu.memory_space<vmem>>, %arg6: memref<128x128xbf16, #tpu.memory_space<vmem>>, %arg7: memref<128x128xbf16, #tpu.memory_space<vmem>>, %arg8: memref<128x128xbf16, #tpu.memory_space<vmem>>, %arg9: memref<16x128xf32, #tpu.memory_space<vmem>>) attributes {dimension_semantics = [#tpu.dimension_semantics<parallel>], iteration_bounds = array<i64: 1>, scalar_prefetch = 0 : i64, scratch_operands = 0 : i64, tpu.core_type = #tpu.core_type<tc>, window_params = [{transform_indices = @transform_0, window_bounds = array<i64: 16, 128>}, {transform_indices = @transform_1, window_bounds = array<i64: 16, 128>}, {pipeline_mode = #tpu.pipeline_mode<synchronous>, transform_indices = @transform_2, window_bounds = array<i64: 128, 128>}, {pipeline_mode = #tpu.pipeline_mode<synchronous>, transform_indices = @transform_3, window_bounds = array<i64: 128, 128>}, {pipeline_mode = #tpu.pipeline_mode<synchronous>, transform_indices = @transform_4, window_bounds = array<i64: 128, 128>}, {pipeline_mode = #tpu.pipeline_mode<synchronous>, transform_indices = @transform_5, window_bounds = array<i64: 128, 128>}, {pipeline_mode = #tpu.pipeline_mode<synchronous>, transform_indices = @transform_6, window_bounds = array<i64: 128, 128>}, {pipeline_mode = #tpu.pipeline_mode<synchronous>, transform_indices = @transform_7, window_bounds = array<i64: 128, 128>}, {transform_indices = @transform_8, window_bounds = array<i64: 16, 128>}]} {
    %c0 = arith.constant 0 : index
    %c0_0 = arith.constant 0 : index
    %0 = vector.load %arg1[%c0, %c0_0] : memref<16x128xf32, #tpu.memory_space<vmem>>, vector<16x128xf32>
    %c0_1 = arith.constant 0 : index
    %c0_2 = arith.constant 0 : index
    %1 = vector.load %arg2[%c0_1, %c0_2] : memref<16x128xf32, #tpu.memory_space<vmem>>, vector<16x128xf32>
    %2 = arith.truncf %0 : vector<16x128xf32> to vector<16x128xbf16>
    %3 = arith.truncf %1 : vector<16x128xf32> to vector<16x128xbf16>
    %c0_3 = arith.constant 0 : index
    %c0_4 = arith.constant 0 : index
    %4 = vector.load %arg3[%c0_3, %c0_4] : memref<128x128xbf16, #tpu.memory_space<vmem>>, vector<128x128xbf16>
    %cst = arith.constant dense<0.000000e+00> : vector<16x128xf32>
    %5 = tpu.matmul %2, %4, %cst {dimension_numbers = #tpu.dot_dimension_numbers<[1], [0], [0], [1], [0, 0, 1, 1], [], []>} : vector<16x128xbf16>, vector<128x128xbf16>, vector<16x128xf32> -> vector<16x128xf32>
    %c0_5 = arith.constant 0 : index
    %c0_6 = arith.constant 0 : index
    %6 = vector.load %arg4[%c0_5, %c0_6] : memref<128x128xbf16, #tpu.memory_space<vmem>>, vector<128x128xbf16>
    %cst_7 = arith.constant dense<0.000000e+00> : vector<16x128xf32>
    %7 = tpu.matmul %2, %6, %cst_7 {dimension_numbers = #tpu.dot_dimension_numbers<[1], [0], [0], [1], [0, 0, 1, 1], [], []>} : vector<16x128xbf16>, vector<128x128xbf16>, vector<16x128xf32> -> vector<16x128xf32>
    %c0_8 = arith.constant 0 : index
    %c0_9 = arith.constant 0 : index
    %8 = vector.load %arg5[%c0_8, %c0_9] : memref<128x128xbf16, #tpu.memory_space<vmem>>, vector<128x128xbf16>
    %cst_10 = arith.constant dense<0.000000e+00> : vector<16x128xf32>
    %9 = tpu.matmul %3, %8, %cst_10 {dimension_numbers = #tpu.dot_dimension_numbers<[1], [0], [0], [1], [0, 0, 1, 1], [], []>} : vector<16x128xbf16>, vector<128x128xbf16>, vector<16x128xf32> -> vector<16x128xf32>
    %c0_11 = arith.constant 0 : index
    %c0_12 = arith.constant 0 : index
    %10 = vector.load %arg6[%c0_11, %c0_12] : memref<128x128xbf16, #tpu.memory_space<vmem>>, vector<128x128xbf16>
    %cst_13 = arith.constant dense<0.000000e+00> : vector<16x128xf32>
    %11 = tpu.matmul %3, %10, %cst_13 {dimension_numbers = #tpu.dot_dimension_numbers<[1], [0], [0], [1], [0, 0, 1, 1], [], []>} : vector<16x128xbf16>, vector<128x128xbf16>, vector<16x128xf32> -> vector<16x128xf32>
    %12 = arith.mulf %5, %9 : vector<16x128xf32>
    %13 = arith.mulf %7, %11 : vector<16x128xf32>
    %14 = arith.subf %12, %13 : vector<16x128xf32>
    %15 = arith.truncf %14 : vector<16x128xf32> to vector<16x128xbf16>
    %16 = arith.mulf %5, %11 : vector<16x128xf32>
    %17 = arith.mulf %7, %9 : vector<16x128xf32>
    %18 = arith.addf %16, %17 : vector<16x128xf32>
    %19 = arith.truncf %18 : vector<16x128xf32> to vector<16x128xbf16>
    %c0_14 = arith.constant 0 : index
    %c0_15 = arith.constant 0 : index
    %20 = vector.load %arg7[%c0_14, %c0_15] : memref<128x128xbf16, #tpu.memory_space<vmem>>, vector<128x128xbf16>
    %cst_16 = arith.constant dense<0.000000e+00> : vector<16x128xf32>
    %21 = tpu.matmul %15, %20, %cst_16 {dimension_numbers = #tpu.dot_dimension_numbers<[1], [0], [0], [1], [0, 0, 1, 1], [], []>} : vector<16x128xbf16>, vector<128x128xbf16>, vector<16x128xf32> -> vector<16x128xf32>
    %c0_17 = arith.constant 0 : index
    %c0_18 = arith.constant 0 : index
    %22 = vector.load %arg8[%c0_17, %c0_18] : memref<128x128xbf16, #tpu.memory_space<vmem>>, vector<128x128xbf16>
    %cst_19 = arith.constant dense<0.000000e+00> : vector<16x128xf32>
    %23 = tpu.matmul %19, %22, %cst_19 {dimension_numbers = #tpu.dot_dimension_numbers<[1], [0], [0], [1], [0, 0, 1, 1], [], []>} : vector<16x128xbf16>, vector<128x128xbf16>, vector<16x128xf32> -> vector<16x128xf32>
    %24 = arith.subf %21, %23 : vector<16x128xf32>
    %cst_20 = arith.constant dense<0xFF800000> : vector<16xf32>
    %25 = vector.multi_reduction <maximumf>, %24, %cst_20 [1] : vector<16x128xf32> to vector<16xf32>
    %26 = vector.shape_cast %25 : vector<16xf32> to vector<16x1xf32>
    %27 = vector.broadcast %26 : vector<16x1xf32> to vector<16x128xf32>
    %28 = arith.subf %24, %27 : vector<16x128xf32>
    %29 = math.exp %28 : vector<16x128xf32>
    %cst_21 = arith.constant dense<0.000000e+00> : vector<16xf32>
    %30 = vector.multi_reduction <add>, %29, %cst_21 [1] : vector<16x128xf32> to vector<16xf32>
    %31 = vector.shape_cast %30 : vector<16xf32> to vector<16x1xf32>
    %32 = tpu.reciprocal %31 {approx = true} : vector<16x1xf32> -> vector<16x1xf32>
    %33 = vector.broadcast %32 : vector<16x1xf32> to vector<16x128xf32>
    %34 = arith.mulf %29, %33 : vector<16x128xf32>
    %35 = arith.mulf %0, %34 : vector<16x128xf32>
    %36 = arith.addf %0, %35 : vector<16x128xf32>
    %c0_22 = arith.constant 0 : index
    %c0_23 = arith.constant 0 : index
    %37 = vector.load %arg9[%c0_22, %c0_23] : memref<16x128xf32, #tpu.memory_space<vmem>>, vector<16x128xf32>
    tpu.vector_store %arg9[%c0_22, %c0_23], %36 {strides = array<i32>} : memref<16x128xf32, #tpu.memory_space<vmem>>, vector<16x128xf32>,
    return
  }
  func.func @transform_0(%arg0: i32) -> (i32, i32) {
    %c0_i32 = arith.constant 0 : i32
    %c0_i32_0 = arith.constant 0 : i32
    return %arg0, %c0_i32 : i32, i32
  }
  func.func @transform_1(%arg0: i32) -> (i32, i32) {
    %c0_i32 = arith.constant 0 : i32
    %c0_i32_0 = arith.constant 0 : i32
    return %arg0, %c0_i32 : i32, i32
  }
  func.func @transform_2(%arg0: i32) -> (i32, i32) {
    %c0_i32 = arith.constant 0 : i32
    %c0_i32_0 = arith.constant 0 : i32
    %c0_i32_1 = arith.constant 0 : i32
    return %c0_i32, %c0_i32_0 : i32, i32
  }
  func.func @transform_3(%arg0: i32) -> (i32, i32) {
    %c0_i32 = arith.constant 0 : i32
    %c0_i32_0 = arith.constant 0 : i32
    %c0_i32_1 = arith.constant 0 : i32
    return %c0_i32, %c0_i32_0 : i32, i32
  }
  func.func @transform_4(%arg0: i32) -> (i32, i32) {
    %c0_i32 = arith.constant 0 : i32
    %c0_i32_0 = arith.constant 0 : i32
    %c0_i32_1 = arith.constant 0 : i32
    return %c0_i32, %c0_i32_0 : i32, i32
  }
  func.func @transform_5(%arg0: i32) -> (i32, i32) {
    %c0_i32 = arith.constant 0 : i32
    %c0_i32_0 = arith.constant 0 : i32
    %c0_i32_1 = arith.constant 0 : i32
    return %c0_i32, %c0_i32_0 : i32, i32
  }
  func.func @transform_6(%arg0: i32) -> (i32, i32) {
    %c0_i32 = arith.constant 0 : i32
    %c0_i32_0 = arith.constant 0 : i32
    %c0_i32_1 = arith.constant 0 : i32
    return %c0_i32, %c0_i32_0 : i32, i32
  }
  func.func @transform_7(%arg0: i32) -> (i32, i32) {
    %c0_i32 = arith.constant 0 : i32
    %c0_i32_0 = arith.constant 0 : i32
    %c0_i32_1 = arith.constant 0 : i32
    return %c0_i32, %c0_i32_0 : i32, i32
  }
  func.func @transform_8(%arg0: i32) -> (i32, i32) {
    %c0_i32 = arith.constant 0 : i32
    %c0_i32_0 = arith.constant 0 : i32
    return %arg0, %c0_i32 : i32, i32
  }
}

</mosaic_0001>

<llo_original>
// kernel: tpu_custom_call.1
$region0: #{tpu_custom_call.1}
  #allocation0 [shape = 'u32[]', space=smem, size = 0x4, offset = 0x4, fixed_abs, tag = 'smem constant byte address 0x4 - core index']
  #allocation1 [shape = 'u32[144,128]{1,0:T(1,128)}', space=vmem, size = 0x12000, scoped, tag = 'internal scratch']
  %s0 = inlined_call_operand.hbm [shape: f32[16,128], index: 0, kind: input, shape index: {}]
  %s1 = inlined_call_operand.hbm [shape: f32[16,128], index: 1, kind: input, shape index: {}]
  %s2 = inlined_call_operand.hbm [shape: bf16[128,128], index: 2, kind: input, shape index: {}]
  %s3 = inlined_call_operand.hbm [shape: bf16[128,128], index: 3, kind: input, shape index: {}]
  %s4 = inlined_call_operand.hbm [shape: bf16[128,128], index: 4, kind: input, shape index: {}]
  %s5 = inlined_call_operand.hbm [shape: bf16[128,128], index: 5, kind: input, shape index: {}]
  %s6 = inlined_call_operand.hbm [shape: bf16[128,128], index: 6, kind: input, shape index: {}]
  %s7 = inlined_call_operand.hbm [shape: bf16[128,128], index: 7, kind: input, shape index: {}]
  %s8 = inlined_call_operand.hbm [shape: f32[16,128], index: 8, kind: output, shape index: {}]
  %s9 = sld [smem:[#allocation0]]
  $region74: #{tpu_custom_call.1} parent=0
    _
  %s11 = ssub.s32 1, %s9
  %s12 = scalar_select 0, %s11, %s9
  $region1: #{tpu_custom_call.1} parent=0
    #allocation2 [shape = 'u8[8192]{0}', space=vmem, size = 0x2000, scoped, tag = 'input window, operand 0, single buffered']
    #allocation3 [shape = 's32[1]{0}', space=sflag, size = 0x4, scoped, tag = 'scoped memory for tpu_custom_call.1']
    #allocation4 [shape = 's32[1]{0}', space=sflag, size = 0x4, scoped, tag = 'scoped memory for tpu_custom_call.1']
    #allocation5 [shape = 'u8[8192]{0}', space=vmem, size = 0x2000, scoped, tag = 'input window, operand 1, single buffered']
    #allocation6 [shape = 's32[1]{0}', space=sflag, size = 0x4, scoped, tag = 'scoped memory for tpu_custom_call.1']
    #allocation7 [shape = 'u8[32768]{0}', space=vmem, size = 0x8000, scoped, tag = 'input window, operand 2, single buffered']
    #allocation8 [shape = 'u8[32768]{0}', space=vmem, size = 0x8000, scoped, tag = 'input window, operand 3, single buffered']
    #allocation9 [shape = 's32[1]{0}', space=sflag, size = 0x4, scoped, tag = 'scoped memory for tpu_custom_call.1']
    #allocation10 [shape = 'u8[32768]{0}', space=vmem, size = 0x8000, scoped, tag = 'input window, operand 4, single buffered']
    #allocation11 [shape = 'u8[32768]{0}', space=vmem, size = 0x8000, scoped, tag = 'input window, operand 5, single buffered']
    #allocation12 [shape = 's32[1]{0}', space=sflag, size = 0x4, scoped, tag = 'scoped memory for tpu_custom_call.1']
    #allocation13 [shape = 'u8[32768]{0}', space=vmem, size = 0x8000, scoped, tag = 'input window, operand 6, single buffered']
    #allocation14 [shape = 'u8[32768]{0}', space=vmem, size = 0x8000, scoped, tag = 'input window, operand 7, single buffered']
    #allocation15 [shape = 's32[1]{0}', space=sflag, size = 0x4, scoped, tag = 'scoped memory for tpu_custom_call.1']
    #allocation16 [shape = 'u8[8192]{0}', space=vmem, size = 0x2000, scoped, tag = 'output window, operand 0, single buffered']
    %13 = vsyncpa [#allocation3], 0
    %14 = vsyncpa [#allocation6], 0
    %15 = vsyncpa [#allocation9], 0
    %16 = vsyncpa [#allocation12], 0
    %17 = vsyncpa [#allocation15], 0
    %18 = vsyncpa [#allocation4], 0
    // Predicated region
    $region2: #{tpu_custom_call.1} parent=1 // pred_check
      _
    $region3: #{tpu_custom_call.1} parent=1 // pred_check_branch
      %20 = sbr.rel (0) target = $region5
    $region4: #{tpu_custom_call.1} parent=1 // pred_region
      %s22 = ssub.s32 256, 256
      %23 = vsyncadd [#allocation3], %s22
      %s24 = sshll.u32 [#allocation2], 4
      %s25 = int_to_ptr.vmem [resolvable:$true] %s24
      %30 = dma.hbm_to_vmem [thread:$0]  %s0, 256, %s25, [#allocation3], 128, 128, 8
    $region5: #{tpu_custom_call.1} parent=1 // pred_fallthru
      _
    // Predicated region
    $region6: #{tpu_custom_call.1} parent=1 // pred_check
      _
    $region7: #{tpu_custom_call.1} parent=1 // pred_check_branch
      %32 = sbr.rel (0) target = $region9
    $region8: #{tpu_custom_call.1} parent=1 // pred_region
      %s34 = ssub.s32 256, 256
      %35 = vsyncadd [#allocation6], %s34
      %s36 = sshll.u32 [#allocation5], 4
      %s37 = int_to_ptr.vmem [resolvable:$true] %s36
      %42 = dma.hbm_to_vmem [thread:$0]  %s1, 256, %s37, [#allocation6], 128, 128, 8
    $region9: #{tpu_custom_call.1} parent=1 // pred_fallthru
      _
    // Predicated region
    $region10: #{tpu_custom_call.1} parent=1 // pred_check
      _
    $region11: #{tpu_custom_call.1} parent=1 // pred_check_branch
      %44 = sbr.rel (0) target = $region13
    $region12: #{tpu_custom_call.1} parent=1 // pred_region
      %s46 = ssub.s32 1024, 1024
      %47 = vsyncadd [#allocation6], %s46
      %s48 = sshll.u32 [#allocation7], 4
      %s49 = int_to_ptr.vmem [resolvable:$true] %s48
      %54 = dma.hbm_to_vmem [thread:$0]  %s2, 1024, %s49, [#allocation6], 64, 64, 4
    $region13: #{tpu_custom_call.1} parent=1 // pred_fallthru
      _
    // Predicated region
    $region14: #{tpu_custom_call.1} parent=1 // pred_check
      _
    $region15: #{tpu_custom_call.1} parent=1 // pred_check_branch
      %56 = sbr.rel (0) target = $region17
    $region16: #{tpu_custom_call.1} parent=1 // pred_region
      %s58 = ssub.s32 1024, 1024
      %59 = vsyncadd [#allocation9], %s58
      %s60 = sshll.u32 [#allocation8], 4
      %s61 = int_to_ptr.vmem [resolvable:$true] %s60
      %66 = dma.hbm_to_vmem [thread:$0]  %s3, 1024, %s61, [#allocation9], 64, 64, 4
    $region17: #{tpu_custom_call.1} parent=1 // pred_fallthru
      _
    // Predicated region
    $region18: #{tpu_custom_call.1} parent=1 // pred_check
      _
    $region19: #{tpu_custom_call.1} parent=1 // pred_check_branch
      %68 = sbr.rel (0) target = $region21
    $region20: #{tpu_custom_call.1} parent=1 // pred_region
      %s70 = ssub.s32 1024, 1024
      %71 = vsyncadd [#allocation9], %s70
      %s72 = sshll.u32 [#allocation10], 4
      %s73 = int_to_ptr.vmem [resolvable:$true] %s72
      %78 = dma.hbm_to_vmem [thread:$0]  %s4, 1024, %s73, [#allocation9], 64, 64, 4
    $region21: #{tpu_custom_call.1} parent=1 // pred_fallthru
      _
    // Predicated region
    $region22: #{tpu_custom_call.1} parent=1 // pred_check
      _
    $region23: #{tpu_custom_call.1} parent=1 // pred_check_branch
      %80 = sbr.rel (0) target = $region25
    $region24: #{tpu_custom_call.1} parent=1 // pred_region
      %s82 = ssub.s32 1024, 1024
      %83 = vsyncadd [#allocation12], %s82
      %s84 = sshll.u32 [#allocation11], 4
      %s85 = int_to_ptr.vmem [resolvable:$true] %s84
      %90 = dma.hbm_to_vmem [thread:$0]  %s5, 1024, %s85, [#allocation12], 64, 64, 4
    $region25: #{tpu_custom_call.1} parent=1 // pred_fallthru
      _
    // Predicated region
    $region26: #{tpu_custom_call.1} parent=1 // pred_check
      _
    $region27: #{tpu_custom_call.1} parent=1 // pred_check_branch
      %92 = sbr.rel (0) target = $region29
    $region28: #{tpu_custom_call.1} parent=1 // pred_region
      %s94 = ssub.s32 1024, 1024
      %95 = vsyncadd [#allocation12], %s94
      %s96 = sshll.u32 [#allocation13], 4
      %s97 = int_to_ptr.vmem [resolvable:$true] %s96
      %102 = dma.hbm_to_vmem [thread:$0]  %s6, 1024, %s97, [#allocation12], 64, 64, 4
    $region29: #{tpu_custom_call.1} parent=1 // pred_fallthru
      _
    // Predicated region
    $region30: #{tpu_custom_call.1} parent=1 // pred_check
      _
    $region31: #{tpu_custom_call.1} parent=1 // pred_check_branch
      %104 = sbr.rel (0) target = $region33
    $region32: #{tpu_custom_call.1} parent=1 // pred_region
      %s106 = ssub.s32 1024, 1024
      %107 = vsyncadd [#allocation15], %s106
      %s108 = sshll.u32 [#allocation14], 4
      %s109 = int_to_ptr.vmem [resolvable:$true] %s108
      %114 = dma.hbm_to_vmem [thread:$0]  %s7, 1024, %s109, [#allocation15], 64, 64, 4
    $region33: #{tpu_custom_call.1} parent=1 // pred_fallthru
      _
    // Predicated region
    $region34: #{tpu_custom_call.1} parent=1 // pred_check
      _
    $region35: #{tpu_custom_call.1} parent=1 // pred_check_branch
      %116 = sbr.rel (0) target = $region37
    $region36: #{tpu_custom_call.1} parent=1 // pred_region
      %117 = dma.done [#allocation3], 256
    $region37: #{tpu_custom_call.1} parent=1 // pred_fallthru
      _
    // Predicated region
    $region38: #{tpu_custom_call.1} parent=1 // pred_check
      _
    $region39: #{tpu_custom_call.1} parent=1 // pred_check_branch
      %119 = sbr.rel (0) target = $region41
    $region40: #{tpu_custom_call.1} parent=1 // pred_region
      %120 = dma.done [#allocation6], 256
    $region41: #{tpu_custom_call.1} parent=1 // pred_fallthru
      _
    // Predicated region
    $region42: #{tpu_custom_call.1} parent=1 // pred_check
      _
    $region43: #{tpu_custom_call.1} parent=1 // pred_check_branch
      %122 = sbr.rel (0) target = $region45
    $region44: #{tpu_custom_call.1} parent=1 // pred_region
      %123 = dma.done [#allocation6], 1024
    $region45: #{tpu_custom_call.1} parent=1 // pred_fallthru
      _
    // Predicated region
    $region46: #{tpu_custom_call.1} parent=1 // pred_check
      _
    $region47: #{tpu_custom_call.1} parent=1 // pred_check_branch
      %125 = sbr.rel (0) target = $region49
    $region48: #{tpu_custom_call.1} parent=1 // pred_region
      %126 = dma.done [#allocation9], 1024
    $region49: #{tpu_custom_call.1} parent=1 // pred_fallthru
      _
    // Predicated region
    $region50: #{tpu_custom_call.1} parent=1 // pred_check
      _
    $region51: #{tpu_custom_call.1} parent=1 // pred_check_branch
      %128 = sbr.rel (0) target = $region53
    $region52: #{tpu_custom_call.1} parent=1 // pred_region
      %129 = dma.done [#allocation9], 1024
    $region53: #{tpu_custom_call.1} parent=1 // pred_fallthru
      _
    // Predicated region
    $region54: #{tpu_custom_call.1} parent=1 // pred_check
      _
    $region55: #{tpu_custom_call.1} parent=1 // pred_check_branch
      %131 = sbr.rel (0) target = $region57
    $region56: #{tpu_custom_call.1} parent=1 // pred_region
      %132 = dma.done [#allocation12], 1024
    $region57: #{tpu_custom_call.1} parent=1 // pred_fallthru
      _
    // Predicated region
    $region58: #{tpu_custom_call.1} parent=1 // pred_check
      _
    $region59: #{tpu_custom_call.1} parent=1 // pred_check_branch
      %134 = sbr.rel (0) target = $region61
    $region60: #{tpu_custom_call.1} parent=1 // pred_region
      %135 = dma.done [#allocation12], 1024
    $region61: #{tpu_custom_call.1} parent=1 // pred_fallthru
      _
    // Predicated region
    $region62: #{tpu_custom_call.1} parent=1 // pred_check
      _
    $region63: #{tpu_custom_call.1} parent=1 // pred_check_branch
      %137 = sbr.rel (0) target = $region65
    $region64: #{tpu_custom_call.1} parent=1 // pred_region
      %138 = dma.done [#allocation15], 1024
    $region65: #{tpu_custom_call.1} parent=1 // pred_fallthru
      _
    %v140 = vld [vmem:[#allocation2] sm:$0xff]
    %v141 = vld [vmem:[#allocation2 + $0x8] sm:$0xff]
    %v142 = vld [vmem:[#allocation5] sm:$0xff]
    %v143 = vld [vmem:[#allocation5 + $0x8] sm:$0xff]
    %v144 = vpack.c.bf16 %v141, %v140
    %v145 = vpack.c.bf16 %v143, %v142
    %v146 = vld [vmem:[#allocation7] sm:$0xf]
    %v147 = vld [vmem:[#allocation7 + $0x4] sm:$0xf]
    %v148 = vld [vmem:[#allocation7 + $0x8] sm:$0xf]
    %v149 = vld [vmem:[#allocation7 + $0xc] sm:$0xf]
    %v150 = vld [vmem:[#allocation7 + $0x10] sm:$0xf]
    %v151 = vld [vmem:[#allocation7 + $0x14] sm:$0xf]
    %v152 = vld [vmem:[#allocation7 + $0x18] sm:$0xf]
    %v153 = vld [vmem:[#allocation7 + $0x1c] sm:$0xf]
    %v154 = vld [vmem:[#allocation7 + $0x20] sm:$0xf]
    %v155 = vld [vmem:[#allocation7 + $0x24] sm:$0xf]
    %v156 = vld [vmem:[#allocation7 + $0x28] sm:$0xf]
    %v157 = vld [vmem:[#allocation7 + $0x2c] sm:$0xf]
    %v158 = vld [vmem:[#allocation7 + $0x30] sm:$0xf]
    %v159 = vld [vmem:[#allocation7 + $0x34] sm:$0xf]
    %v160 = vld [vmem:[#allocation7 + $0x38] sm:$0xf]
    %v161 = vld [vmem:[#allocation7 + $0x3c] sm:$0xf]
    %v178 = vunpack.c.l.b16 %v146
    %v179 = vunpack.c.l.b16 %v147
    %v180 = vunpack.c.l.b16 %v148
    %v181 = vunpack.c.l.b16 %v149
    %v182 = vunpack.c.l.b16 %v150
    %v183 = vunpack.c.l.b16 %v151
    %v184 = vunpack.c.l.b16 %v152
    %v185 = vunpack.c.l.b16 %v153
    %v186 = vunpack.c.l.b16 %v154
    %v187 = vunpack.c.l.b16 %v155
    %v188 = vunpack.c.l.b16 %v156
    %v189 = vunpack.c.l.b16 %v157
    %v190 = vunpack.c.l.b16 %v158
    %v191 = vunpack.c.l.b16 %v159
    %v192 = vunpack.c.l.b16 %v160
    %v193 = vunpack.c.l.b16 %v161
    %v194 = vpack.c.b16 %v179, %v178
    %v195 = vpack.c.b16 %v181, %v180
    %v196 = vpack.c.b16 %v183, %v182
    %v197 = vpack.c.b16 %v185, %v184
    %v198 = vpack.c.b16 %v187, %v186
    %v199 = vpack.c.b16 %v189, %v188
    %v200 = vpack.c.b16 %v191, %v190
    %v201 = vpack.c.b16 %v193, %v192
    %210 = vmatprep.subr.bf16.mxu0 0
    %211 = vmatpush1.bf16.msra.mxu0 %v194
    %212 = vmatprep.subr.bf16.mxu0 0
    %213 = vmatpush1.bf16.msra.mxu0 %v195
    %214 = vmatprep.subr.bf16.mxu0 0
    %215 = vmatpush1.bf16.msra.mxu0 %v196
    %216 = vmatprep.subr.bf16.mxu0 0
    %217 = vmatpush1.bf16.msra.mxu0 %v197
    %218 = vmatprep.subr.bf16.mxu0 0
    %219 = vmatpush1.bf16.msra.mxu0 %v198
    %220 = vmatprep.subr.bf16.mxu0 0
    %221 = vmatpush1.bf16.msra.mxu0 %v199
    %222 = vmatprep.subr.bf16.mxu0 0
    %223 = vmatpush1.bf16.msra.mxu0 %v200
    %224 = vmatprep.subr.bf16.mxu0 0
    %225 = vmatpush1.bf16.msra.mxu0 %v201
    %226 = vmatprep.subr.bf16.mxu0 0
    %227 = vmatpush1.bf16.msra.mxu0 0
    %228 = vmatprep.subr.bf16.mxu0 0
    %229 = vmatpush1.bf16.msra.mxu0 0
    %230 = vmatprep.subr.bf16.mxu0 0
    %231 = vmatpush1.bf16.msra.mxu0 0
    %232 = vmatprep.subr.bf16.mxu0 0
    %233 = vmatpush1.bf16.msra.mxu0 0
    %234 = vmatprep.subr.bf16.mxu0 0
    %235 = vmatpush1.bf16.msra.mxu0 0
    %236 = vmatprep.subr.bf16.mxu0 0
    %237 = vmatpush1.bf16.msra.mxu0 0
    %238 = vmatprep.subr.bf16.mxu0 0
    %239 = vmatpush1.bf16.msra.mxu0 0
    %240 = vmatprep.subr.bf16.mxu0 0
    %241 = vmatpush1.bf16.msra.mxu0 0
    %242 = vmatprep.mubr.bf16.mxu0 0
    %243 = vmatmul.mubr.bf16.gmra.mrb[0].mxu0 %v144
    %v244 = vpop.f32.mrb[0].mxu0
    %v245 = vadd.f32 0.0, %v244
    %v246 = vpop.f32.mrb[0].mxu0
    %v247 = vpop.f32.mrb[0].mxu0
    %v248 = vadd.f32 0.0, %v247
    %v249 = vpop.f32.mrb[0].mxu0
    %250 = vdwg.mxu0
    %v251 = vld [vmem:[#allocation8] sm:$0xf]
    %v252 = vld [vmem:[#allocation8 + $0x4] sm:$0xf]
    %v253 = vld [vmem:[#allocation8 + $0x8] sm:$0xf]
    %v254 = vld [vmem:[#allocation8 + $0xc] sm:$0xf]
    %v255 = vld [vmem:[#allocation8 + $0x10] sm:$0xf]
    %v256 = vld [vmem:[#allocation8 + $0x14] sm:$0xf]
    %v257 = vld [vmem:[#allocation8 + $0x18] sm:$0xf]
    %v258 = vld [vmem:[#allocation8 + $0x1c] sm:$0xf]
    %v259 = vld [vmem:[#allocation8 + $0x20] sm:$0xf]
    %v260 = vld [vmem:[#allocation8 + $0x24] sm:$0xf]
    %v261 = vld [vmem:[#allocation8 + $0x28] sm:$0xf]
    %v262 = vld [vmem:[#allocation8 + $0x2c] sm:$0xf]
    %v263 = vld [vmem:[#allocation8 + $0x30] sm:$0xf]
    %v264 = vld [vmem:[#allocation8 + $0x34] sm:$0xf]
    %v265 = vld [vmem:[#allocation8 + $0x38] sm:$0xf]
    %v266 = vld [vmem:[#allocation8 + $0x3c] sm:$0xf]
    %v283 = vunpack.c.l.b16 %v251
    %v284 = vunpack.c.l.b16 %v252
    %v285 = vunpack.c.l.b16 %v253
    %v286 = vunpack.c.l.b16 %v254
    %v287 = vunpack.c.l.b16 %v255
    %v288 = vunpack.c.l.b16 %v256
    %v289 = vunpack.c.l.b16 %v257
    %v290 = vunpack.c.l.b16 %v258
    %v291 = vunpack.c.l.b16 %v259
    %v292 = vunpack.c.l.b16 %v260
    %v293 = vunpack.c.l.b16 %v261
    %v294 = vunpack.c.l.b16 %v262
    %v295 = vunpack.c.l.b16 %v263
    %v296 = vunpack.c.l.b16 %v264
    %v297 = vunpack.c.l.b16 %v265
    %v298 = vunpack.c.l.b16 %v266
    %v299 = vpack.c.b16 %v284, %v283
    %v300 = vpack.c.b16 %v286, %v285
    %v301 = vpack.c.b16 %v288, %v287
    %v302 = vpack.c.b16 %v290, %v289
    %v303 = vpack.c.b16 %v292, %v291
    %v304 = vpack.c.b16 %v294, %v293
    %v305 = vpack.c.b16 %v296, %v295
    %v306 = vpack.c.b16 %v298, %v297
    %315 = vmatprep.subr.bf16.mxu0 0
    %316 = vmatpush1.bf16.msra.mxu0 %v299
    %317 = vmatprep.subr.bf16.mxu0 0
    %318 = vmatpush1.bf16.msra.mxu0 %v300
    %319 = vmatprep.subr.bf16.mxu0 0
    %320 = vmatpush1.bf16.msra.mxu0 %v301
    %321 = vmatprep.subr.bf16.mxu0 0
    %322 = vmatpush1.bf16.msra.mxu0 %v302
    %323 = vmatprep.subr.bf16.mxu0 0
    %324 = vmatpush1.bf16.msra.mxu0 %v303
    %325 = vmatprep.subr.bf16.mxu0 0
    %326 = vmatpush1.bf16.msra.mxu0 %v304
    %327 = vmatprep.subr.bf16.mxu0 0
    %328 = vmatpush1.bf16.msra.mxu0 %v305
    %329 = vmatprep.subr.bf16.mxu0 0
    %330 = vmatpush1.bf16.msra.mxu0 %v306
    %331 = vmatprep.subr.bf16.mxu0 0
    %332 = vmatpush1.bf16.msra.mxu0 0
    %333 = vmatprep.subr.bf16.mxu0 0
    %334 = vmatpush1.bf16.msra.mxu0 0
    %335 = vmatprep.subr.bf16.mxu0 0
    %336 = vmatpush1.bf16.msra.mxu0 0
    %337 = vmatprep.subr.bf16.mxu0 0
    %338 = vmatpush1.bf16.msra.mxu0 0
    %339 = vmatprep.subr.bf16.mxu0 0
    %340 = vmatpush1.bf16.msra.mxu0 0
    %341 = vmatprep.subr.bf16.mxu0 0
    %342 = vmatpush1.bf16.msra.mxu0 0
    %343 = vmatprep.subr.bf16.mxu0 0
    %344 = vmatpush1.bf16.msra.mxu0 0
    %345 = vmatprep.subr.bf16.mxu0 0
    %346 = vmatpush1.bf16.msra.mxu0 0
    %347 = vmatprep.mubr.bf16.mxu0 0
    %348 = vmatmul.mubr.bf16.gmra.mrb[0].mxu0 %v144
    %v349 = vpop.f32.mrb[0].mxu0
    %v350 = vadd.f32 0.0, %v349
    %v351 = vpop.f32.mrb[0].mxu0
    %v352 = vpop.f32.mrb[0].mxu0
    %v353 = vadd.f32 0.0, %v352
    %v354 = vpop.f32.mrb[0].mxu0
    %355 = vdwg.mxu0
    %v356 = vld [vmem:[#allocation10] sm:$0xf]
    %v357 = vld [vmem:[#allocation10 + $0x4] sm:$0xf]
    %v358 = vld [vmem:[#allocation10 + $0x8] sm:$0xf]
    %v359 = vld [vmem:[#allocation10 + $0xc] sm:$0xf]
    %v360 = vld [vmem:[#allocation10 + $0x10] sm:$0xf]
    %v361 = vld [vmem:[#allocation10 + $0x14] sm:$0xf]
    %v362 = vld [vmem:[#allocation10 + $0x18] sm:$0xf]
    %v363 = vld [vmem:[#allocation10 + $0x1c] sm:$0xf]
    %v364 = vld [vmem:[#allocation10 + $0x20] sm:$0xf]
    %v365 = vld [vmem:[#allocation10 + $0x24] sm:$0xf]
    %v366 = vld [vmem:[#allocation10 + $0x28] sm:$0xf]
    %v367 = vld [vmem:[#allocation10 + $0x2c] sm:$0xf]
    %v368 = vld [vmem:[#allocation10 + $0x30] sm:$0xf]
    %v369 = vld [vmem:[#allocation10 + $0x34] sm:$0xf]
    %v370 = vld [vmem:[#allocation10 + $0x38] sm:$0xf]
    %v371 = vld [vmem:[#allocation10 + $0x3c] sm:$0xf]
    %v388 = vunpack.c.l.b16 %v356
    %v389 = vunpack.c.l.b16 %v357
    %v390 = vunpack.c.l.b16 %v358
    %v391 = vunpack.c.l.b16 %v359
    %v392 = vunpack.c.l.b16 %v360
    %v393 = vunpack.c.l.b16 %v361
    %v394 = vunpack.c.l.b16 %v362
    %v395 = vunpack.c.l.b16 %v363
    %v396 = vunpack.c.l.b16 %v364
    %v397 = vunpack.c.l.b16 %v365
    %v398 = vunpack.c.l.b16 %v366
    %v399 = vunpack.c.l.b16 %v367
    %v400 = vunpack.c.l.b16 %v368
    %v401 = vunpack.c.l.b16 %v369
    %v402 = vunpack.c.l.b16 %v370
    %v403 = vunpack.c.l.b16 %v371
    %v404 = vpack.c.b16 %v389, %v388
    %v405 = vpack.c.b16 %v391, %v390
    %v406 = vpack.c.b16 %v393, %v392
    %v407 = vpack.c.b16 %v395, %v394
    %v408 = vpack.c.b16 %v397, %v396
    %v409 = vpack.c.b16 %v399, %v398
    %v410 = vpack.c.b16 %v401, %v400
    %v411 = vpack.c.b16 %v403, %v402
    %420 = vmatprep.subr.bf16.mxu0 0
    %421 = vmatpush1.bf16.msra.mxu0 %v404
    %422 = vmatprep.subr.bf16.mxu0 0
    %423 = vmatpush1.bf16.msra.mxu0 %v405
    %424 = vmatprep.subr.bf16.mxu0 0
    %425 = vmatpush1.bf16.msra.mxu0 %v406
    %426 = vmatprep.subr.bf16.mxu0 0
    %427 = vmatpush1.bf16.msra.mxu0 %v407
    %428 = vmatprep.subr.bf16.mxu0 0
    %429 = vmatpush1.bf16.msra.mxu0 %v408
    %430 = vmatprep.subr.bf16.mxu0 0
    %431 = vmatpush1.bf16.msra.mxu0 %v409
    %432 = vmatprep.subr.bf16.mxu0 0
    %433 = vmatpush1.bf16.msra.mxu0 %v410
    %434 = vmatprep.subr.bf16.mxu0 0
    %435 = vmatpush1.bf16.msra.mxu0 %v411
    %436 = vmatprep.subr.bf16.mxu0 0
    %437 = vmatpush1.bf16.msra.mxu0 0
    %438 = vmatprep.subr.bf16.mxu0 0
    %439 = vmatpush1.bf16.msra.mxu0 0
    %440 = vmatprep.subr.bf16.mxu0 0
    %441 = vmatpush1.bf16.msra.mxu0 0
    %442 = vmatprep.subr.bf16.mxu0 0
    %443 = vmatpush1.bf16.msra.mxu0 0
    %444 = vmatprep.subr.bf16.mxu0 0
    %445 = vmatpush1.bf16.msra.mxu0 0
    %446 = vmatprep.subr.bf16.mxu0 0
    %447 = vmatpush1.bf16.msra.mxu0 0
    %448 = vmatprep.subr.bf16.mxu0 0
    %449 = vmatpush1.bf16.msra.mxu0 0
    %450 = vmatprep.subr.bf16.mxu0 0
    %451 = vmatpush1.bf16.msra.mxu0 0
    %452 = vmatprep.mubr.bf16.mxu0 0
    %453 = vmatmul.mubr.bf16.gmra.mrb[0].mxu0 %v145
    %v454 = vpop.f32.mrb[0].mxu0
    %v455 = vadd.f32 0.0, %v454
    %v456 = vpop.f32.mrb[0].mxu0
    %v457 = vpop.f32.mrb[0].mxu0
    %v458 = vadd.f32 0.0, %v457
    %v459 = vpop.f32.mrb[0].mxu0
    %460 = vdwg.mxu0
    %v461 = vld [vmem:[#allocation11] sm:$0xf]
    %v462 = vld [vmem:[#allocation11 + $0x4] sm:$0xf]
    %v463 = vld [vmem:[#allocation11 + $0x8] sm:$0xf]
    %v464 = vld [vmem:[#allocation11 + $0xc] sm:$0xf]
    %v465 = vld [vmem:[#allocation11 + $0x10] sm:$0xf]
    %v466 = vld [vmem:[#allocation11 + $0x14] sm:$0xf]
    %v467 = vld [vmem:[#allocation11 + $0x18] sm:$0xf]
    %v468 = vld [vmem:[#allocation11 + $0x1c] sm:$0xf]
    %v469 = vld [vmem:[#allocation11 + $0x20] sm:$0xf]
    %v470 = vld [vmem:[#allocation11 + $0x24] sm:$0xf]
    %v471 = vld [vmem:[#allocation11 + $0x28] sm:$0xf]
    %v472 = vld [vmem:[#allocation11 + $0x2c] sm:$0xf]
    %v473 = vld [vmem:[#allocation11 + $0x30] sm:$0xf]
    %v474 = vld [vmem:[#allocation11 + $0x34] sm:$0xf]
    %v475 = vld [vmem:[#allocation11 + $0x38] sm:$0xf]
    %v476 = vld [vmem:[#allocation11 + $0x3c] sm:$0xf]
    %v493 = vunpack.c.l.b16 %v461
    %v494 = vunpack.c.l.b16 %v462
    %v495 = vunpack.c.l.b16 %v463
    %v496 = vunpack.c.l.b16 %v464
    %v497 = vunpack.c.l.b16 %v465
    %v498 = vunpack.c.l.b16 %v466
    %v499 = vunpack.c.l.b16 %v467
    %v500 = vunpack.c.l.b16 %v468
    %v501 = vunpack.c.l.b16 %v469
    %v502 = vunpack.c.l.b16 %v470
    %v503 = vunpack.c.l.b16 %v471
    %v504 = vunpack.c.l.b16 %v472
    %v505 = vunpack.c.l.b16 %v473
    %v506 = vunpack.c.l.b16 %v474
    %v507 = vunpack.c.l.b16 %v475
    %v508 = vunpack.c.l.b16 %v476
    %v509 = vpack.c.b16 %v494, %v493
    %v510 = vpack.c.b16 %v496, %v495
    %v511 = vpack.c.b16 %v498, %v497
    %v512 = vpack.c.b16 %v500, %v499
    %v513 = vpack.c.b16 %v502, %v501
    %v514 = vpack.c.b16 %v504, %v503
    %v515 = vpack.c.b16 %v506, %v505
    %v516 = vpack.c.b16 %v508, %v507
    %525 = vmatprep.subr.bf16.mxu0 0
    %526 = vmatpush1.bf16.msra.mxu0 %v509
    %527 = vmatprep.subr.bf16.mxu0 0
    %528 = vmatpush1.bf16.msra.mxu0 %v510
    %529 = vmatprep.subr.bf16.mxu0 0
    %530 = vmatpush1.bf16.msra.mxu0 %v511
    %531 = vmatprep.subr.bf16.mxu0 0
    %532 = vmatpush1.bf16.msra.mxu0 %v512
    %533 = vmatprep.subr.bf16.mxu0 0
    %534 = vmatpush1.bf16.msra.mxu0 %v513
    %535 = vmatprep.subr.bf16.mxu0 0
    %536 = vmatpush1.bf16.msra.mxu0 %v514
    %537 = vmatprep.subr.bf16.mxu0 0
    %538 = vmatpush1.bf16.msra.mxu0 %v515
    %539 = vmatprep.subr.bf16.mxu0 0
    %540 = vmatpush1.bf16.msra.mxu0 %v516
    %541 = vmatprep.subr.bf16.mxu0 0
    %542 = vmatpush1.bf16.msra.mxu0 0
    %543 = vmatprep.subr.bf16.mxu0 0
    %544 = vmatpush1.bf16.msra.mxu0 0
    %545 = vmatprep.subr.bf16.mxu0 0
    %546 = vmatpush1.bf16.msra.mxu0 0
    %547 = vmatprep.subr.bf16.mxu0 0
    %548 = vmatpush1.bf16.msra.mxu0 0
    %549 = vmatprep.subr.bf16.mxu0 0
    %550 = vmatpush1.bf16.msra.mxu0 0
    %551 = vmatprep.subr.bf16.mxu0 0
    %552 = vmatpush1.bf16.msra.mxu0 0
    %553 = vmatprep.subr.bf16.mxu0 0
    %554 = vmatpush1.bf16.msra.mxu0 0
    %555 = vmatprep.subr.bf16.mxu0 0
    %556 = vmatpush1.bf16.msra.mxu0 0
    %557 = vmatprep.mubr.bf16.mxu0 0
    %558 = vmatmul.mubr.bf16.gmra.mrb[0].mxu0 %v145
    %v559 = vpop.f32.mrb[0].mxu0
    %v560 = vadd.f32 0.0, %v559
    %v561 = vpop.f32.mrb[0].mxu0
    %v562 = vpop.f32.mrb[0].mxu0
    %v563 = vadd.f32 0.0, %v562
    %v564 = vpop.f32.mrb[0].mxu0
    %565 = vdwg.mxu0
    %v566 = vmul.f32 %v245, %v455
    %v567 = vmul.f32 %v248, %v458
    %v568 = vmul.f32 %v350, %v560
    %v569 = vmul.f32 %v353, %v563
    %v570 = vsub.f32 %v566, %v568
    %v571 = vsub.f32 %v567, %v569
    %v572 = vpack.c.bf16 %v571, %v570
    %v573 = vmul.f32 %v245, %v560
    %v574 = vmul.f32 %v248, %v563
    %v575 = vmul.f32 %v350, %v455
    %v576 = vmul.f32 %v353, %v458
    %v577 = vadd.f32 %v573, %v575
    %v578 = vadd.f32 %v574, %v576
    %v579 = vpack.c.bf16 %v578, %v577
    %v580 = vld [vmem:[#allocation13] sm:$0xf]
    %v581 = vld [vmem:[#allocation13 + $0x4] sm:$0xf]
    %v582 = vld [vmem:[#allocation13 + $0x8] sm:$0xf]
    %v583 = vld [vmem:[#allocation13 + $0xc] sm:$0xf]
    %v584 = vld [vmem:[#allocation13 + $0x10] sm:$0xf]
    %v585 = vld [vmem:[#allocation13 + $0x14] sm:$0xf]
    %v586 = vld [vmem:[#allocation13 + $0x18] sm:$0xf]
    %v587 = vld [vmem:[#allocation13 + $0x1c] sm:$0xf]
    %v588 = vld [vmem:[#allocation13 + $0x20] sm:$0xf]
    %v589 = vld [vmem:[#allocation13 + $0x24] sm:$0xf]
    %v590 = vld [vmem:[#allocation13 + $0x28] sm:$0xf]
    %v591 = vld [vmem:[#allocation13 + $0x2c] sm:$0xf]
    %v592 = vld [vmem:[#allocation13 + $0x30] sm:$0xf]
    %v593 = vld [vmem:[#allocation13 + $0x34] sm:$0xf]
    %v594 = vld [vmem:[#allocation13 + $0x38] sm:$0xf]
    %v595 = vld [vmem:[#allocation13 + $0x3c] sm:$0xf]
    %v612 = vunpack.c.l.b16 %v580
    %v613 = vunpack.c.l.b16 %v581
    %v614 = vunpack.c.l.b16 %v582
    %v615 = vunpack.c.l.b16 %v583
    %v616 = vunpack.c.l.b16 %v584
    %v617 = vunpack.c.l.b16 %v585
    %v618 = vunpack.c.l.b16 %v586
    %v619 = vunpack.c.l.b16 %v587
    %v620 = vunpack.c.l.b16 %v588
    %v621 = vunpack.c.l.b16 %v589
    %v622 = vunpack.c.l.b16 %v590
    %v623 = vunpack.c.l.b16 %v591
    %v624 = vunpack.c.l.b16 %v592
    %v625 = vunpack.c.l.b16 %v593
    %v626 = vunpack.c.l.b16 %v594
    %v627 = vunpack.c.l.b16 %v595
    %v628 = vpack.c.b16 %v613, %v612
    %v629 = vpack.c.b16 %v615, %v614
    %v630 = vpack.c.b16 %v617, %v616
    %v631 = vpack.c.b16 %v619, %v618
    %v632 = vpack.c.b16 %v621, %v620
    %v633 = vpack.c.b16 %v623, %v622
    %v634 = vpack.c.b16 %v625, %v624
    %v635 = vpack.c.b16 %v627, %v626
    %644 = vmatprep.subr.bf16.mxu0 0
    %645 = vmatpush1.bf16.msra.mxu0 %v628
    %646 = vmatprep.subr.bf16.mxu0 0
    %647 = vmatpush1.bf16.msra.mxu0 %v629
    %648 = vmatprep.subr.bf16.mxu0 0
    %649 = vmatpush1.bf16.msra.mxu0 %v630
    %650 = vmatprep.subr.bf16.mxu0 0
    %651 = vmatpush1.bf16.msra.mxu0 %v631
    %652 = vmatprep.subr.bf16.mxu0 0
    %653 = vmatpush1.bf16.msra.mxu0 %v632
    %654 = vmatprep.subr.bf16.mxu0 0
    %655 = vmatpush1.bf16.msra.mxu0 %v633
    %656 = vmatprep.subr.bf16.mxu0 0
    %657 = vmatpush1.bf16.msra.mxu0 %v634
    %658 = vmatprep.subr.bf16.mxu0 0
    %659 = vmatpush1.bf16.msra.mxu0 %v635
    %660 = vmatprep.subr.bf16.mxu0 0
    %661 = vmatpush1.bf16.msra.mxu0 0
    %662 = vmatprep.subr.bf16.mxu0 0
    %663 = vmatpush1.bf16.msra.mxu0 0
    %664 = vmatprep.subr.bf16.mxu0 0
    %665 = vmatpush1.bf16.msra.mxu0 0
    %666 = vmatprep.subr.bf16.mxu0 0
    %667 = vmatpush1.bf16.msra.mxu0 0
    %668 = vmatprep.subr.bf16.mxu0 0
    %669 = vmatpush1.bf16.msra.mxu0 0
    %670 = vmatprep.subr.bf16.mxu0 0
    %671 = vmatpush1.bf16.msra.mxu0 0
    %672 = vmatprep.subr.bf16.mxu0 0
    %673 = vmatpush1.bf16.msra.mxu0 0
    %674 = vmatprep.subr.bf16.mxu0 0
    %675 = vmatpush1.bf16.msra.mxu0 0
    %676 = vmatprep.mubr.bf16.mxu0 0
    %677 = vmatmul.mubr.bf16.gmra.mrb[0].mxu0 %v572
    %v678 = vpop.f32.mrb[0].mxu0
    %v679 = vadd.f32 0.0, %v678
    %v680 = vpop.f32.mrb[0].mxu0
    %v681 = vpop.f32.mrb[0].mxu0
    %v682 = vadd.f32 0.0, %v681
    %v683 = vpop.f32.mrb[0].mxu0
    %684 = vdwg.mxu0
    %v685 = vld [vmem:[#allocation14] sm:$0xf]
    %v686 = vld [vmem:[#allocation14 + $0x4] sm:$0xf]
    %v687 = vld [vmem:[#allocation14 + $0x8] sm:$0xf]
    %v688 = vld [vmem:[#allocation14 + $0xc] sm:$0xf]
    %v689 = vld [vmem:[#allocation14 + $0x10] sm:$0xf]
    %v690 = vld [vmem:[#allocation14 + $0x14] sm:$0xf]
    %v691 = vld [vmem:[#allocation14 + $0x18] sm:$0xf]
    %v692 = vld [vmem:[#allocation14 + $0x1c] sm:$0xf]
    %v693 = vld [vmem:[#allocation14 + $0x20] sm:$0xf]
    %v694 = vld [vmem:[#allocation14 + $0x24] sm:$0xf]
    %v695 = vld [vmem:[#allocation14 + $0x28] sm:$0xf]
    %v696 = vld [vmem:[#allocation14 + $0x2c] sm:$0xf]
    %v697 = vld [vmem:[#allocation14 + $0x30] sm:$0xf]
    %v698 = vld [vmem:[#allocation14 + $0x34] sm:$0xf]
    %v699 = vld [vmem:[#allocation14 + $0x38] sm:$0xf]
    %v700 = vld [vmem:[#allocation14 + $0x3c] sm:$0xf]
    %v717 = vunpack.c.l.b16 %v685
    %v718 = vunpack.c.l.b16 %v686
    %v719 = vunpack.c.l.b16 %v687
    %v720 = vunpack.c.l.b16 %v688
    %v721 = vunpack.c.l.b16 %v689
    %v722 = vunpack.c.l.b16 %v690
    %v723 = vunpack.c.l.b16 %v691
    %v724 = vunpack.c.l.b16 %v692
    %v725 = vunpack.c.l.b16 %v693
    %v726 = vunpack.c.l.b16 %v694
    %v727 = vunpack.c.l.b16 %v695
    %v728 = vunpack.c.l.b16 %v696
    %v729 = vunpack.c.l.b16 %v697
    %v730 = vunpack.c.l.b16 %v698
    %v731 = vunpack.c.l.b16 %v699
    %v732 = vunpack.c.l.b16 %v700
    %v733 = vpack.c.b16 %v718, %v717
    %v734 = vpack.c.b16 %v720, %v719
    %v735 = vpack.c.b16 %v722, %v721
    %v736 = vpack.c.b16 %v724, %v723
    %v737 = vpack.c.b16 %v726, %v725
    %v738 = vpack.c.b16 %v728, %v727
    %v739 = vpack.c.b16 %v730, %v729
    %v740 = vpack.c.b16 %v732, %v731
    %749 = vmatprep.subr.bf16.mxu0 0
    %750 = vmatpush1.bf16.msra.mxu0 %v733
    %751 = vmatprep.subr.bf16.mxu0 0
    %752 = vmatpush1.bf16.msra.mxu0 %v734
    %753 = vmatprep.subr.bf16.mxu0 0
    %754 = vmatpush1.bf16.msra.mxu0 %v735
    %755 = vmatprep.subr.bf16.mxu0 0
    %756 = vmatpush1.bf16.msra.mxu0 %v736
    %757 = vmatprep.subr.bf16.mxu0 0
    %758 = vmatpush1.bf16.msra.mxu0 %v737
    %759 = vmatprep.subr.bf16.mxu0 0
    %760 = vmatpush1.bf16.msra.mxu0 %v738
    %761 = vmatprep.subr.bf16.mxu0 0
    %762 = vmatpush1.bf16.msra.mxu0 %v739
    %763 = vmatprep.subr.bf16.mxu0 0
    %764 = vmatpush1.bf16.msra.mxu0 %v740
    %765 = vmatprep.subr.bf16.mxu0 0
    %766 = vmatpush1.bf16.msra.mxu0 0
    %767 = vmatprep.subr.bf16.mxu0 0
    %768 = vmatpush1.bf16.msra.mxu0 0
    %769 = vmatprep.subr.bf16.mxu0 0
    %770 = vmatpush1.bf16.msra.mxu0 0
    %771 = vmatprep.subr.bf16.mxu0 0
    %772 = vmatpush1.bf16.msra.mxu0 0
    %773 = vmatprep.subr.bf16.mxu0 0
    %774 = vmatpush1.bf16.msra.mxu0 0
    %775 = vmatprep.subr.bf16.mxu0 0
    %776 = vmatpush1.bf16.msra.mxu0 0
    %777 = vmatprep.subr.bf16.mxu0 0
    %778 = vmatpush1.bf16.msra.mxu0 0
    %779 = vmatprep.subr.bf16.mxu0 0
    %780 = vmatpush1.bf16.msra.mxu0 0
    %781 = vmatprep.mubr.bf16.mxu0 0
    %782 = vmatmul.mubr.bf16.gmra.mrb[0].mxu0 %v579
    %v783 = vpop.f32.mrb[0].mxu0
    %v784 = vadd.f32 0.0, %v783
    %v785 = vpop.f32.mrb[0].mxu0
    %v786 = vpop.f32.mrb[0].mxu0
    %v787 = vadd.f32 0.0, %v786
    %v788 = vpop.f32.mrb[0].mxu0
    %789 = vdwg.mxu0
    %v790 = vsub.f32 %v679, %v784
    %v791 = vsub.f32 %v682, %v787
    %792 = vmax.xlane.f32.xlu0 %v790
    %v793 = vpop.xlane.xlu0 %792
    %794 = vmax.xlane.f32.xlu0 %v791
    %v795 = vpop.xlane.xlu0 %794
    %v796 = vsub.f32 %v790, %v793
    %v797 = vsub.f32 %v791, %v795
    %v798 = vmul.f32 %v796, 1.442695
    %v799 = vpow.pop %v798
    %v800 = vmul.f32 %v797, 1.442695
    %v801 = vpow.pop %v800
    %802 = vadd.xlane.f32.xlu0 %v799
    %v803 = vpop.xlane.xlu0 %802
    %804 = vadd.xlane.f32.xlu0 %v801
    %v805 = vpop.xlane.xlu0 %804
    %v806 = vrcp.pop %v803
    %v807 = vrcp.pop %v805
    %v808 = vmul.f32 %v799, %v806
    %v809 = vmul.f32 %v801, %v807
    %v810 = vmul.f32 %v140, %v808
    %v811 = vmul.f32 %v141, %v809
    %v812 = vadd.f32 %v140, %v810
    %v813 = vadd.f32 %v141, %v811
    %814 = vst [vmem:[#allocation16] sm:$0xff] %v812
    %815 = vst [vmem:[#allocation16 + $0x8] sm:$0xff] %v813
    // Predicated region
    $region66: #{tpu_custom_call.1} parent=1 // pred_check
      _
    $region67: #{tpu_custom_call.1} parent=1 // pred_check_branch
      %817 = sbr.rel (0) target = $region69
    $region68: #{tpu_custom_call.1} parent=1 // pred_region
      %s819 = ssub.s32 256, 256
      %820 = vsyncadd [#allocation4], %s819
      %s821 = sshll.u32 [#allocation16], 4
      %s822 = int_to_ptr.vmem [resolvable:$true] %s821
      %827 = dma.vmem_to_hbm [thread:$0]  %s822, 256, %s8, [#allocation4], 128, 128, 8
    $region69: #{tpu_custom_call.1} parent=1 // pred_fallthru
      _
    // Predicated region
    $region70: #{tpu_custom_call.1} parent=1 // pred_check
      _
    $region71: #{tpu_custom_call.1} parent=1 // pred_check_branch
      %829 = sbr.rel (0) target = $region73
    $region72: #{tpu_custom_call.1} parent=1 // pred_region
      %830 = dma.done [#allocation4], 256
    $region73: #{tpu_custom_call.1} parent=1 // pred_fallthru
      _
    %831 = vsyncpa [#allocation3], 1
    %832 = vsyncpa [#allocation6], 1
    %833 = vsyncpa [#allocation9], 1
    %834 = vsyncpa [#allocation12], 1
    %835 = vsyncpa [#allocation15], 1
    %836 = vsyncpa [#allocation4], 1

</llo_original>
